<compile_context>
chip_gen: v7x
topology: tpu7x:2x2x1
jax: 0.10.0
libtpu: 0.0.40
codegen_flags: <defaults>
</compile_context>

<pallas_src>
import functools

import jax
import jax.numpy as jnp
from jax import lax
from jax.experimental import pallas as pl
from jax.experimental.pallas import tpu as pltpu


def _round_up(x, m):
    return ((x + m - 1) // m) * m


def _ipow(x, n):
    # explicit repeated multiplies (avoid jnp.power -> exp/log on the EUP)
    acc = x
    for _ in range(n - 1):
        acc = acc * x
    return acc


def _dice_partial_kernel(pred_ref, lab_ref, num_ref, den_ref, *,
                         ts, tiles_per_split, s_valid, p_exp, label_is_index):
    # pred_ref: (1, C, TS) bf16 logits
    # lab_ref : (1, 1, TS) int32 class ids  OR  (1, C, TS) bf16 one-hot
    # num_ref/den_ref: (1, 1, C, 1) f32 accumulators, resident across the
    # spatial grid axis (reduction axis last; init via pl.when at s == 0).
    split = pl.program_id(0)
    s = pl.program_id(2)

    @pl.when(s == 0)
    def _():
        num_ref[...] = jnp.zeros_like(num_ref)
        den_ref[...] = jnp.zeros_like(den_ref)

    logits = pred_ref[0].astype(jnp.float32)               # (C, TS)

    if label_is_index:
        cls_iota = lax.broadcasted_iota(jnp.int32, logits.shape, 0)
        target = (lab_ref[0] == cls_iota).astype(jnp.float32)   # (C, TS)
    else:
        target = lab_ref[0].astype(jnp.float32)                 # (C, TS)

    # softmax over the class (sublane) axis; approx reciprocal runs on the EUP
    m = jnp.max(logits, axis=0, keepdims=True)              # (1, TS)
    e = jnp.exp(logits - m)                                  # (C, TS)
    p = e * pl.reciprocal(jnp.sum(e, axis=0, keepdims=True), approx=True)

    if p_exp == 2:
        den_term = p * p + target * target
    elif isinstance(p_exp, int) and p_exp >= 1:
        den_term = _ipow(p, p_exp) + _ipow(target, p_exp)
    else:
        den_term = jnp.power(p, p_exp) + jnp.power(target, p_exp)

    # num: padded columns have target == 0, so no masking is ever needed.
    num_ref[0, 0] += jnp.sum(p * target, axis=-1, keepdims=True)       # (C, 1)

    if s_valid is None:
        den_ref[0, 0] += jnp.sum(den_term, axis=-1, keepdims=True)
    else:
        # Only tiles that actually contain padded columns pay for the mask.
        tile_start = (split * tiles_per_split + s) * ts
        has_pad = tile_start + ts > s_valid

        @pl.when(jnp.logical_not(has_pad))
        def _():
            den_ref[0, 0] += jnp.sum(den_term, axis=-1, keepdims=True)

        @pl.when(has_pad)
        def _():
            col = tile_start + lax.broadcasted_iota(jnp.int32, den_term.shape, 1)
            den_ref[0, 0] += jnp.sum(
                jnp.where(col < s_valid, den_term, 0.0), axis=-1, keepdims=True)


def dice_loss(predict, label, *, smooth=1.0, p=2, weight=None,
              ignore_index=None, reduction="mean", ts=None,
              pred_stream_dtype=jnp.bfloat16):
    """predict: (N, C, *spatial) float logits.
    label: either one-hot of the same shape as predict (PyTorch interface), or
    an integer class-index map of shape (N, *spatial) (cheaper HBM stream).

    Matches PyTorch DiceLoss.forward (softmax over dim=1, per-class
    BinaryDiceLoss(smooth, p, reduction), sum over classes != ignore_index,
    divide by C).
    """
    N, C = predict.shape[0], predict.shape[1]
    spatial = tuple(predict.shape[2:])
    S = 1
    for d in spatial:
        S *= d

    if tuple(label.shape) == tuple(predict.shape):
        label_is_index = False
    elif tuple(label.shape) == (N,) + spatial:
        label_is_index = True
    else:
        raise AssertionError("predict & target shape do not match")

    # Halve the dominant HBM stream; in-kernel math stays f32.
    pred2 = predict.reshape(N, C, S).astype(pred_stream_dtype)
    if label_is_index:
        lab2 = label.reshape(N, 1, S).astype(jnp.int32)
    else:
        lab2 = label.reshape(N, C, S).astype(jnp.bfloat16)   # 0/1 exact in bf16

    # v7x megacore: if the batch axis alone cannot feed two TensorCores, add a
    # 2-way "parallel" split of the spatial tiles (harmless on v5e/v6e).
    n_split = 2 if (N % 2 == 1 and S > 128) else 1

    # Tile size: biggest lane-dense tile whose in-kernel f32 temporaries plus
    # double-buffered inputs stay well inside the scoped VMEM limit.
    VMEM_BUDGET = 24 << 20        # headroom under the 32 MiB scoped limit
    F32_LIVE_COPIES = 8           # pessimistic live (C, ts) f32 temps + 2x2 input bufs
    ts_cap = max(128, (VMEM_BUDGET // (C * 4 * F32_LIVE_COPIES)) // 128 * 128)
    ts = ts_cap if ts is None else min(int(ts), ts_cap)
    ts = min(ts, _round_up(pl.cdiv(S, n_split), 128))
    ts = max(128, (ts // 128) * 128)

    n_tiles = pl.cdiv(S, ts)
    ts = _round_up(pl.cdiv(S, n_tiles), 128)     # rebalance -> minimal padding
    n_tiles = pl.cdiv(S, ts)
    n_tiles = _round_up(n_tiles, n_split)
    tiles_per_split = n_tiles // n_split
    s_pad = n_tiles * ts

    if s_pad != S:
        pad = s_pad - S
        pred2 = jnp.pad(pred2, ((0, 0), (0, 0), (0, pad)))
        lab2 = jnp.pad(lab2, ((0, 0), (0, 0), (0, pad)),
                       constant_values=(-1 if label_is_index else 0))
        s_valid = S
    else:
        s_valid = None

    lab_block = (1, 1, ts) if label_is_index else (1, C, ts)

    kernel = functools.partial(
        _dice_partial_kernel, ts=ts, tiles_per_split=tiles_per_split,
        s_valid=s_valid, p_exp=p, label_is_index=label_is_index)

    grid = (n_split, N, tiles_per_split)

    num_out, den_out = pl.pallas_call(
        kernel,
        out_shape=(jax.ShapeDtypeStruct((n_split, N, C, 1), jnp.float32),
                   jax.ShapeDtypeStruct((n_split, N, C, 1), jnp.float32)),
        grid_spec=pltpu.PrefetchScalarGridSpec(
            num_scalar_prefetch=0,
            grid=grid,
            in_specs=[
                pl.BlockSpec((1, C, ts),
                             lambda c, n, s: (n, 0, c * tiles_per_split + s)),
                pl.BlockSpec(lab_block,
                             lambda c, n, s: (n, 0, c * tiles_per_split + s)),
            ],
            out_specs=[
                pl.BlockSpec((1, 1, C, 1), lambda c, n, s: (c, n, 0, 0)),
                pl.BlockSpec((1, 1, C, 1), lambda c, n, s: (c, n, 0, 0)),
            ],
        ),
        compiler_params=pltpu.CompilerParams(
            dimension_semantics=("parallel", "parallel", "arbitrary"),
            vmem_limit_bytes=32 * 1024 * 1024),
    )(pred2, lab2)

    num_s = jnp.sum(num_out[..., 0], axis=0)    # (N, C)  sum_spatial p*t
    den_s = jnp.sum(den_out[..., 0], axis=0)    # (N, C)  sum_spatial p^p + t^p

    dice = 1.0 - (2.0 * num_s + smooth) / (den_s + smooth)   # (N, C)

    if ignore_index is not None:
        class_mask = jnp.arange(C) != ignore_index
    else:
        class_mask = jnp.ones((C,), dtype=bool)
    w = (jnp.asarray(weight, dtype=jnp.float32) if weight is not None
         else jnp.ones((C,), dtype=jnp.float32))

    if reduction == "mean":
        per_class = jnp.mean(dice, axis=0)                    # (C,)
        total = jnp.sum(jnp.where(class_mask, per_class * w, 0.0))
        return total / C
    elif reduction == "sum":
        per_class = jnp.sum(dice, axis=0)
        total = jnp.sum(jnp.where(class_mask, per_class * w, 0.0))
        return total / C
    elif reduction == "none":
        contrib = jnp.where(class_mask[None, :], dice * w[None, :], 0.0)
        return jnp.sum(contrib, axis=1) / C                   # (N,)
    else:
        raise Exception("Unexpected reduction {}".format(reduction))


def _ref_dice(predict, label_onehot, smooth=1.0, ignore_index=None):
    """Plain-JAX reference mirroring the PyTorch DiceLoss forward.

    Mirrors the wrapper's bf16 streaming of the logits so that only the
    kernel's accumulation order / approx-reciprocal differ.
    """
    pred = predict.astype(jnp.bfloat16).astype(jnp.float32)
    Np, Cc = pred.shape[0], pred.shape[1]
    prob = jax.nn.softmax(pred, axis=1)
    pf = prob.reshape(Np, Cc, -1)
    lf = label_onehot.reshape(Np, Cc, -1).astype(jnp.float32)
    num = 2.0 * jnp.sum(pf * lf, axis=2) + smooth
    den = jnp.sum(pf ** 2 + lf ** 2, axis=2) + smooth
    dice = 1.0 - num / den            # (N, C)
    per_class = dice.mean(axis=0)     # BinaryDiceLoss reduction='mean'
    if ignore_index is not None:
        per_class = per_class.at[ignore_index].set(0.0)
    return jnp.sum(per_class) / Cc


if __name__ == "__main__":
    key = jax.random.PRNGKey(0)
    k1, k2, k3, k4, k5, k6 = jax.random.split(key, 6)

    # test 1: one-hot labels (PyTorch interface), S multiple of 128, no padding
    N, C, H, W = 2, 4, 16, 16
    predict = jax.random.normal(k1, (N, C, H, W), dtype=jnp.float32)
    cls = jax.random.randint(k2, (N, H, W), 0, C, dtype=jnp.int32)
    label = jax.nn.one_hot(cls, C, axis=1, dtype=jnp.float32)     # (N, C, H, W)

    loss = jax.block_until_ready(dice_loss(predict, label))
    ref = _ref_dice(predict, label)
    assert jnp.allclose(loss, ref, rtol=1e-3, atol=1e-3), (loss, ref)

    # test 2: class-index labels, ignore_index, odd spatial size (padding path)
    H2, W2 = 15, 15
    predict2 = jax.random.normal(k3, (N, C, H2, W2), dtype=jnp.float32)
    cls2 = jax.random.randint(k4, (N, H2, W2), 0, C, dtype=jnp.int32)
    label2 = jax.nn.one_hot(cls2, C, axis=1, dtype=jnp.float32)

    loss2 = jax.block_until_ready(dice_loss(predict2, cls2, ignore_index=2))
    ref2 = _ref_dice(predict2, label2, ignore_index=2)
    assert jnp.allclose(loss2, ref2, rtol=1e-3, atol=1e-3), (loss2, ref2)

    # test 3: N=1 exercises the 2-way spatial megacore split, C not multiple of 8
    N3, C3, H3, W3 = 1, 3, 20, 20
    predict3 = jax.random.normal(k5, (N3, C3, H3, W3), dtype=jnp.float32)
    cls3 = jax.random.randint(k6, (N3, H3, W3), 0, C3, dtype=jnp.int32)
    label3 = jax.nn.one_hot(cls3, C3, axis=1, dtype=jnp.float32)

    loss3 = jax.block_until_ready(dice_loss(predict3, label3))
    ref3 = _ref_dice(predict3, label3)
    assert jnp.allclose(loss3, ref3, rtol=1e-3, atol=1e-3), (loss3, ref3)

    print("KERNEL_OK")
</pallas_src>

<mosaic_0001>
module attributes {stable_mosaic.version = 11 : i64} {
  func.func @_dice_partial_kernel(%arg0: i32, %arg1: i32, %arg2: i32, %arg3: memref<1x4x256xbf16, #tpu.memory_space<vmem>>, %arg4: memref<1x4x256xbf16, #tpu.memory_space<vmem>>, %arg5: memref<1x1x4x1xf32, #tpu.memory_space<vmem>>, %arg6: memref<1x1x4x1xf32, #tpu.memory_space<vmem>>) attributes {dimension_semantics = [#tpu.dimension_semantics<parallel>, #tpu.dimension_semantics<parallel>, #tpu.dimension_semantics<arbitrary>], iteration_bounds = array<i64: 1, 2, 1>, scalar_prefetch = 0 : i64, scratch_operands = 0 : i64, tpu.core_type = #tpu.core_type<tc>, window_params = [{transform_indices = @transform_0, window_bounds = array<i64: 1, 4, 256>}, {transform_indices = @transform_1, window_bounds = array<i64: 1, 4, 256>}, {transform_indices = @transform_2, window_bounds = array<i64: 1, 1, 4, 1>}, {transform_indices = @transform_3, window_bounds = array<i64: 1, 1, 4, 1>}]} {
    %c0_i32 = arith.constant 0 : i32
    %0 = arith.cmpi eq, %arg2, %c0_i32 : i32
    %1 = arith.extui %0 : i1 to i32
    %c0_i32_0 = arith.constant 0 : i32
    %2 = arith.cmpi ne, %1, %c0_i32_0 : i32
    scf.if %2 {
      %cst_25 = arith.constant 0.000000e+00 : f32
      %39 = vector.broadcast %cst_25 : f32 to vector<1x1x4x1xf32>
      %c0_26 = arith.constant 0 : index
      %c0_27 = arith.constant 0 : index
      %c0_28 = arith.constant 0 : index
      %c0_29 = arith.constant 0 : index
      %40 = vector.load %arg5[%c0_26, %c0_27, %c0_28, %c0_29] : memref<1x1x4x1xf32, #tpu.memory_space<vmem>>, vector<1x1x4x1xf32>
      tpu.vector_store %arg5[%c0_26, %c0_27, %c0_28, %c0_29], %39 {strides = array<i32>} : memref<1x1x4x1xf32, #tpu.memory_space<vmem>>, vector<1x1x4x1xf32>,
      %cst_30 = arith.constant 0.000000e+00 : f32
      %41 = vector.broadcast %cst_30 : f32 to vector<1x1x4x1xf32>
      %c0_31 = arith.constant 0 : index
      %c0_32 = arith.constant 0 : index
      %c0_33 = arith.constant 0 : index
      %c0_34 = arith.constant 0 : index
      %42 = vector.load %arg6[%c0_31, %c0_32, %c0_33, %c0_34] : memref<1x1x4x1xf32, #tpu.memory_space<vmem>>, vector<1x1x4x1xf32>
      tpu.vector_store %arg6[%c0_31, %c0_32, %c0_33, %c0_34], %41 {strides = array<i32>} : memref<1x1x4x1xf32, #tpu.memory_space<vmem>>, vector<1x1x4x1xf32>,
    } else {
    }
    %c0 = arith.constant 0 : index
    %c0_1 = arith.constant 0 : index
    %c0_2 = arith.constant 0 : index
    %3 = vector.load %arg3[%c0, %c0_1, %c0_2] : memref<1x4x256xbf16, #tpu.memory_space<vmem>>, vector<1x4x256xbf16>
    %4 = vector.shape_cast %3 : vector<1x4x256xbf16> to vector<4x256xbf16>
    %5 = arith.extf %4 : vector<4x256xbf16> to vector<4x256xf32>
    %c0_3 = arith.constant 0 : index
    %c0_4 = arith.constant 0 : index
    %c0_5 = arith.constant 0 : index
    %6 = vector.load %arg4[%c0_3, %c0_4, %c0_5] : memref<1x4x256xbf16, #tpu.memory_space<vmem>>, vector<1x4x256xbf16>
    %7 = vector.shape_cast %6 : vector<1x4x256xbf16> to vector<4x256xbf16>
    %8 = arith.extf %7 : vector<4x256xbf16> to vector<4x256xf32>
    %cst = arith.constant dense<0xFF800000> : vector<256xf32>
    %9 = vector.multi_reduction <maximumf>, %5, %cst [0] : vector<4x256xf32> to vector<256xf32>
    %10 = vector.shape_cast %9 : vector<256xf32> to vector<1x256xf32>
    %11 = vector.broadcast %10 : vector<1x256xf32> to vector<4x256xf32>
    %12 = arith.subf %5, %11 : vector<4x256xf32>
    %13 = math.exp %12 : vector<4x256xf32>
    %cst_6 = arith.constant dense<0.000000e+00> : vector<256xf32>
    %14 = vector.multi_reduction <add>, %13, %cst_6 [0] : vector<4x256xf32> to vector<256xf32>
    %15 = vector.shape_cast %14 : vector<256xf32> to vector<1x256xf32>
    %16 = tpu.reciprocal %15 {approx = true} : vector<1x256xf32> -> vector<1x256xf32>
    %17 = vector.broadcast %16 : vector<1x256xf32> to vector<4x256xf32>
    %18 = arith.mulf %13, %17 : vector<4x256xf32>
    %19 = arith.mulf %18, %18 : vector<4x256xf32>
    %20 = arith.mulf %8, %8 : vector<4x256xf32>
    %21 = arith.addf %19, %20 : vector<4x256xf32>
    %c0_7 = arith.constant 0 : index
    %c0_8 = arith.constant 0 : index
    %c0_9 = arith.constant 0 : index
    %c0_10 = arith.constant 0 : index
    %22 = vector.load %arg5[%c0_7, %c0_8, %c0_9, %c0_10] : memref<1x1x4x1xf32, #tpu.memory_space<vmem>>, vector<1x1x4x1xf32>
    %23 = vector.shape_cast %22 : vector<1x1x4x1xf32> to vector<4x1xf32>
    %24 = arith.mulf %18, %8 : vector<4x256xf32>
    %cst_11 = arith.constant dense<0.000000e+00> : vector<4xf32>
    %25 = vector.multi_reduction <add>, %24, %cst_11 [1] : vector<4x256xf32> to vector<4xf32>
    %26 = vector.shape_cast %25 : vector<4xf32> to vector<4x1xf32>
    %27 = arith.addf %23, %26 : vector<4x1xf32>
    %c0_12 = arith.constant 0 : index
    %c0_13 = arith.constant 0 : index
    %c0_14 = arith.constant 0 : index
    %c0_15 = arith.constant 0 : index
    %28 = vector.load %arg5[%c0_12, %c0_13, %c0_14, %c0_15] : memref<1x1x4x1xf32, #tpu.memory_space<vmem>>, vector<1x1x4x1xf32>
    %29 = vector.shape_cast %28 : vector<1x1x4x1xf32> to vector<4x1xf32>
    %30 = vector.shape_cast %27 : vector<4x1xf32> to vector<1x1x4x1xf32>
    tpu.vector_store %arg5[%c0_12, %c0_13, %c0_14, %c0_15], %30 {strides = array<i32>} : memref<1x1x4x1xf32, #tpu.memory_space<vmem>>, vector<1x1x4x1xf32>,
    %c0_16 = arith.constant 0 : index
    %c0_17 = arith.constant 0 : index
    %c0_18 = arith.constant 0 : index
    %c0_19 = arith.constant 0 : index
    %31 = vector.load %arg6[%c0_16, %c0_17, %c0_18, %c0_19] : memref<1x1x4x1xf32, #tpu.memory_space<vmem>>, vector<1x1x4x1xf32>
    %32 = vector.shape_cast %31 : vector<1x1x4x1xf32> to vector<4x1xf32>
    %cst_20 = arith.constant dense<0.000000e+00> : vector<4xf32>
    %33 = vector.multi_reduction <add>, %21, %cst_20 [1] : vector<4x256xf32> to vector<4xf32>
    %34 = vector.shape_cast %33 : vector<4xf32> to vector<4x1xf32>
    %35 = arith.addf %32, %34 : vector<4x1xf32>
    %c0_21 = arith.constant 0 : index
    %c0_22 = arith.constant 0 : index
    %c0_23 = arith.constant 0 : index
    %c0_24 = arith.constant 0 : index
    %36 = vector.load %arg6[%c0_21, %c0_22, %c0_23, %c0_24] : memref<1x1x4x1xf32, #tpu.memory_space<vmem>>, vector<1x1x4x1xf32>
    %37 = vector.shape_cast %36 : vector<1x1x4x1xf32> to vector<4x1xf32>
    %38 = vector.shape_cast %35 : vector<4x1xf32> to vector<1x1x4x1xf32>
    tpu.vector_store %arg6[%c0_21, %c0_22, %c0_23, %c0_24], %38 {strides = array<i32>} : memref<1x1x4x1xf32, #tpu.memory_space<vmem>>, vector<1x1x4x1xf32>,
    return
  }
  func.func @transform_0(%arg0: i32, %arg1: i32, %arg2: i32) -> (i32, i32, i32) {
    %c1_i32 = arith.constant 1 : i32
    %0 = arith.muli %arg0, %c1_i32 : i32
    %1 = arith.addi %0, %arg2 : i32
    %c0_i32 = arith.constant 0 : i32
    %c0_i32_0 = arith.constant 0 : i32
    return %arg1, %c0_i32, %1 : i32, i32, i32
  }
  func.func @transform_1(%arg0: i32, %arg1: i32, %arg2: i32) -> (i32, i32, i32) {
    %c1_i32 = arith.constant 1 : i32
    %0 = arith.muli %arg0, %c1_i32 : i32
    %1 = arith.addi %0, %arg2 : i32
    %c0_i32 = arith.constant 0 : i32
    %c0_i32_0 = arith.constant 0 : i32
    return %arg1, %c0_i32, %1 : i32, i32, i32
  }
  func.func @transform_2(%arg0: i32, %arg1: i32, %arg2: i32) -> (i32, i32, i32, i32) {
    %c0_i32 = arith.constant 0 : i32
    %c0_i32_0 = arith.constant 0 : i32
    %c0_i32_1 = arith.constant 0 : i32
    return %arg0, %arg1, %c0_i32, %c0_i32_0 : i32, i32, i32, i32
  }
  func.func @transform_3(%arg0: i32, %arg1: i32, %arg2: i32) -> (i32, i32, i32, i32) {
    %c0_i32 = arith.constant 0 : i32
    %c0_i32_0 = arith.constant 0 : i32
    %c0_i32_1 = arith.constant 0 : i32
    return %arg0, %arg1, %c0_i32, %c0_i32_0 : i32, i32, i32, i32
  }
}

</mosaic_0001>

<llo_original>
// kernel: tpu_custom_call.1
$region0: #{tpu_custom_call.1}
  #allocation0 [shape = 'u32[]', space=smem, size = 0x4, offset = 0x4, fixed_abs, tag = 'smem constant byte address 0x4 - core index']
  #allocation1 [shape = 'u32[144,128]{1,0:T(1,128)}', space=vmem, size = 0x12000, scoped, tag = 'internal scratch']
  %s0 = inlined_call_operand.hbm [shape: bf16[2,4,256], index: 0, kind: input, shape index: {}]
  %s1 = inlined_call_operand.hbm [shape: bf16[2,4,256], index: 1, kind: input, shape index: {}]
  %s2 = inlined_call_operand.vmem [shape: f32[1,2,4,1], index: 2, kind: output, shape index: {0}]
  %s3 = inlined_call_operand.vmem [shape: f32[1,2,4,1], index: 3, kind: output, shape index: {1}]
  %4 = xla_tuple %s2, %s3
  %s5 = sld [smem:[#allocation0]]
  $region61: #{tpu_custom_call.1} parent=0
    _
  %s7 = ssub.s32 1, %s5
  %s8 = scalar_select 0, %s7, %s5
  $region1: #{tpu_custom_call.1} parent=0
    #allocation2 [shape = 'u8[4096]{0}', space=vmem, size = 0x1000, scoped, tag = 'input window, operand 0']
    #allocation3 [shape = 's32[2]{0}', space=sflag, size = 0x8, scoped, tag = 'scoped memory for tpu_custom_call.1']
    #allocation4 [shape = 'u8[4096]{0}', space=vmem, size = 0x1000, scoped, tag = 'input window, operand 1']
    #allocation5 [shape = 's32[2]{0}', space=sflag, size = 0x8, scoped, tag = 'scoped memory for tpu_custom_call.1']
    %9 = vsyncpa [#allocation3], 0
    %s10 = scalar_lea.sflag [#allocation3], 1
    %11 = vsyncpa %s10, 0
    %12 = vsyncpa [#allocation5], 0
    %s13 = scalar_lea.sflag [#allocation5], 1
    %14 = vsyncpa %s13, 0
    loop: start=0, step=1, limit=4
    $region2: #{tpu_custom_call.1} parent=1 // loop_pre_header
      _
    $region3: #{tpu_custom_call.1} parent=1 // loop_header
      %s16 = sphi 0, %s20
      %p17 = scmp.ge.s32.totalorder %s16, 4
      %s23 = sphi 0, %s42
      %s24 = sphi 0, %s38
      %s25 = sphi 0, %s34
      %s26 = sphi 0, %s23
      %s27 = sphi 0, %s24
      %s28 = sphi 0, %s25
      %s29 = sphi 0, %s26
      %s30 = sphi 0, %s27
      %s31 = sphi 0, %s28
      %s49 = sphi 0, %s51
      %s52 = sphi 0, %s49
      %s53 = sphi 0, %s52
      %s69 = sphi 0, %s53
      %s79 = sphi 0, %s81
      %s82 = sphi 0, %s79
      %s83 = sphi 0, %s82
      %s99 = sphi 0, %s83
      %s107 = sphi 0, %s109
      %s110 = sphi 0, %s107
      %s111 = sphi 0, %s110
      %s127 = sphi 0, %s111
      %s135 = sphi 0, %s137
      %s138 = sphi 0, %s135
      %s139 = sphi 0, %s138
      %s155 = sphi 0, %s139
    $region4: #{tpu_custom_call.1} parent=1 // loop_header_branch
      %19 = sbr.rel (%p17) target = $region8
    $region5: #{tpu_custom_call.1} parent=1 // loop_body
      %s21 = ssub.s32 %s16, 1
      %s22 = ssub.s32 %s16, 2
      %s32 = sadd.s32 1, %s25
      %p33 = scmp.ge.s32.totalorder %s32, 1
      %s34 = scalar_select %p33, 0, %s32
      %s35 = sadd.s32 1, %s24
      %s36 = scalar_select %p33, %s35, %s24
      %p37 = scmp.ge.s32.totalorder %s36, 2
      %s38 = scalar_select %p37, 0, %s36
      %s39 = sadd.s32 1, %s23
      %s40 = scalar_select %p37, %s39, %s23
      %p41 = scmp.ge.s32.totalorder %s40, 1
      %s42 = scalar_select %p41, 0, %s40
      %s43 = sadd.s32 %s23, %s25
      %s44 = sadd.s32 %s42, %s34
      %s45 = ssub.s32 %s24, %s38
      %s46 = ssub.s32 %s43, %s44
      %s47 = sor.u32 %s45, %s46
      %p48 = scmp.eq.s32.totalorder %s47, 0
      %s50 = sadd.s32 %s49, 1
      %s51 = scalar_select %p48, %s49, %s50
      %p54 = pneg %p48
      %p55 = scmp.eq.s32.totalorder %s16, 1
      %p56 = por %p54, %p55
      %p57 = scmp.ne.s32.totalorder %s49, %s52
      %p58 = scmp.eq.s32.totalorder %s16, 0
      %p59 = por %p57, %p58
      %p60 = scmp.ne.s32.totalorder %s49, %s52
      %p61 = scmp.eq.s32.totalorder %s21, 1
      %p62 = por %p60, %p61
      %p63 = scmp.ne.s32.totalorder %s52, %s53
      %p64 = scmp.eq.s32.totalorder %s21, 0
      %p65 = por %p63, %p64
      %p66 = scmp.ne.s32.totalorder %s52, %s53
      %p67 = scmp.eq.s32.totalorder %s22, 1
      %p68 = por %p66, %p67
      %p70 = scmp.ne.s32.totalorder %s53, %s69
      %p71 = scmp.eq.s32.totalorder %s22, 0
      %p72 = por %p70, %p71
      %s73 = sadd.s32 %s23, %s25
      %s74 = sadd.s32 %s42, %s34
      %s75 = ssub.s32 %s24, %s38
      %s76 = ssub.s32 %s73, %s74
      %s77 = sor.u32 %s75, %s76
      %p78 = scmp.eq.s32.totalorder %s77, 0
      %s80 = sadd.s32 %s79, 1
      %s81 = scalar_select %p78, %s79, %s80
      %p84 = pneg %p78
      %p85 = scmp.eq.s32.totalorder %s16, 1
      %p86 = por %p84, %p85
      %p87 = scmp.ne.s32.totalorder %s79, %s82
      %p88 = scmp.eq.s32.totalorder %s16, 0
      %p89 = por %p87, %p88
      %p90 = scmp.ne.s32.totalorder %s79, %s82
      %p91 = scmp.eq.s32.totalorder %s21, 1
      %p92 = por %p90, %p91
      %p93 = scmp.ne.s32.totalorder %s82, %s83
      %p94 = scmp.eq.s32.totalorder %s21, 0
      %p95 = por %p93, %p94
      %p96 = scmp.ne.s32.totalorder %s82, %s83
      %p97 = scmp.eq.s32.totalorder %s22, 1
      %p98 = por %p96, %p97
      %p100 = scmp.ne.s32.totalorder %s83, %s99
      %p101 = scmp.eq.s32.totalorder %s22, 0
      %p102 = por %p100, %p101
      %s103 = ssub.s32 %s23, %s42
      %s104 = ssub.s32 %s24, %s38
      %s105 = sor.u32 %s103, %s104
      %p106 = scmp.eq.s32.totalorder %s105, 0
      %s108 = sadd.s32 %s107, 1
      %s109 = scalar_select %p106, %s107, %s108
      %p112 = pneg %p106
      %p113 = scmp.eq.s32.totalorder %s16, 1
      %p114 = por %p112, %p113
      %p115 = scmp.ne.s32.totalorder %s107, %s110
      %p116 = scmp.eq.s32.totalorder %s16, 0
      %p117 = por %p115, %p116
      %p118 = scmp.ne.s32.totalorder %s107, %s110
      %p119 = scmp.eq.s32.totalorder %s21, 1
      %p120 = por %p118, %p119
      %p121 = scmp.ne.s32.totalorder %s110, %s111
      %p122 = scmp.eq.s32.totalorder %s21, 0
      %p123 = por %p121, %p122
      %p124 = scmp.ne.s32.totalorder %s110, %s111
      %p125 = scmp.eq.s32.totalorder %s22, 1
      %p126 = por %p124, %p125
      %p128 = scmp.ne.s32.totalorder %s111, %s127
      %p129 = scmp.eq.s32.totalorder %s22, 0
      %p130 = por %p128, %p129
      %s131 = ssub.s32 %s23, %s42
      %s132 = ssub.s32 %s24, %s38
      %s133 = sor.u32 %s131, %s132
      %p134 = scmp.eq.s32.totalorder %s133, 0
      %s136 = sadd.s32 %s135, 1
      %s137 = scalar_select %p134, %s135, %s136
      %p140 = pneg %p134
      %p141 = scmp.eq.s32.totalorder %s16, 1
      %p142 = por %p140, %p141
      %p143 = scmp.ne.s32.totalorder %s135, %s138
      %p144 = scmp.eq.s32.totalorder %s16, 0
      %p145 = por %p143, %p144
      %p146 = scmp.ne.s32.totalorder %s135, %s138
      %p147 = scmp.eq.s32.totalorder %s21, 1
      %p148 = por %p146, %p147
      %p149 = scmp.ne.s32.totalorder %s138, %s139
      %p150 = scmp.eq.s32.totalorder %s21, 0
      %p151 = por %p149, %p150
      %p152 = scmp.ne.s32.totalorder %s138, %s139
      %p153 = scmp.eq.s32.totalorder %s22, 1
      %p154 = por %p152, %p153
      %p156 = scmp.ne.s32.totalorder %s139, %s155
      %p157 = scmp.eq.s32.totalorder %s22, 0
      %p158 = por %p156, %p157
      %p159 = scmp.le.s32.totalorder 1, %s16
      %p160 = scmp.lt.s32.totalorder %s16, 3
      %p161 = pnand %p159, %p160
      %p162 = pneg %p161
      // Predicated region
      $region9: #{tpu_custom_call.1} parent=5 // pred_check
        _
      $region10: #{tpu_custom_call.1} parent=5 // pred_check_branch
        %164 = sbr.rel (%p161) target = $region12
      $region11: #{tpu_custom_call.1} parent=5 // pred_region
        %s165 = ssub.s32 %s16, 1
      $region12: #{tpu_custom_call.1} parent=5 // pred_fallthru
        _
      %p166 = scmp.lt.s32.totalorder %s16, 2
      // Predicated region
      $region13: #{tpu_custom_call.1} parent=5 // pred_check
        %p167 = pneg %p166
      $region14: #{tpu_custom_call.1} parent=5 // pred_check_branch
        %169 = sbr.rel (%p167) target = $region16
      $region15: #{tpu_custom_call.1} parent=5 // pred_region
        // Predicated region
        $region17: #{tpu_custom_call.1} parent=15 // pred_check
          %p170 = pneg %p59
        $region18: #{tpu_custom_call.1} parent=15 // pred_check_branch
          %172 = sbr.rel (%p170) target = $region20
        $region19: #{tpu_custom_call.1} parent=15 // pred_region
          %s173 = sand.u32 %s49, 1
          %s174 = scalar_lea.sflag [#allocation3], %s173
          %s175 = sand.u32 %s49, 1
          %s176 = smul.addr %s175, 4
          %s177 = scalar_lea.vmem [#allocation2], %s176
          %s178 = sadd.s32 %s23, %s25
          %s179 = smul.u32 2, %s178
          %s181 = ssub.s32 64, 64
          %182 = vsyncadd %s174, %s181
          %s183 = smul.addr %s24, 2
          %s184 = sadd.s32 %s179, %s183
          %s185 = smul.addr %s184, 32
          %s186 = scalar_lea.hbm %s0, %s185
          %s188 = sshll.u32 %s177, 4
          %s189 = int_to_ptr.vmem [resolvable:$true] %s188
          %191 = dma.hbm_to_vmem [thread:$0]  %s186, 64, %s189, %s174
        $region20: #{tpu_custom_call.1} parent=15 // pred_fallthru
          _
        // Predicated region
        $region21: #{tpu_custom_call.1} parent=15 // pred_check
          %p192 = pneg %p89
        $region22: #{tpu_custom_call.1} parent=15 // pred_check_branch
          %194 = sbr.rel (%p192) target = $region24
        $region23: #{tpu_custom_call.1} parent=15 // pred_region
          %s195 = sand.u32 %s79, 1
          %s196 = scalar_lea.sflag [#allocation5], %s195
          %s197 = sand.u32 %s79, 1
          %s198 = smul.addr %s197, 4
          %s199 = scalar_lea.vmem [#allocation4], %s198
          %s200 = sadd.s32 %s23, %s25
          %s201 = smul.u32 2, %s200
          %s203 = ssub.s32 64, 64
          %204 = vsyncadd %s196, %s203
          %s205 = smul.addr %s24, 2
          %s206 = sadd.s32 %s201, %s205
          %s207 = smul.addr %s206, 32
          %s208 = scalar_lea.hbm %s1, %s207
          %s210 = sshll.u32 %s199, 4
          %s211 = int_to_ptr.vmem [resolvable:$true] %s210
          %213 = dma.hbm_to_vmem [thread:$0]  %s208, 64, %s211, %s196
        $region24: #{tpu_custom_call.1} parent=15 // pred_fallthru
          _
      $region16: #{tpu_custom_call.1} parent=5 // pred_fallthru
        _
      %p214 = scmp.le.s32.totalorder 1, %s16
      %p215 = scmp.lt.s32.totalorder %s16, 3
      %p216 = pnand %p214, %p215
      %p217 = pneg %p216
      // Predicated region
      $region25: #{tpu_custom_call.1} parent=5 // pred_check
        _
      $region26: #{tpu_custom_call.1} parent=5 // pred_check_branch
        %219 = sbr.rel (%p216) target = $region28
      $region27: #{tpu_custom_call.1} parent=5 // pred_region
        %s220 = ssub.s32 %s16, 1
        %s221 = sand.u32 %s52, 1
        %s222 = scalar_lea.sflag [#allocation3], %s221
        %s223 = sand.u32 %s52, 1
        %s224 = smul.addr %s223, 4
        %s225 = scalar_lea.vmem [#allocation2], %s224
        // Predicated region
        $region29: #{tpu_custom_call.1} parent=27 // pred_check
          %p226 = pneg %p65
        $region30: #{tpu_custom_call.1} parent=27 // pred_check_branch
          %228 = sbr.rel (%p226) target = $region32
        $region31: #{tpu_custom_call.1} parent=27 // pred_region
          %229 = dma.done %s222, 64
        $region32: #{tpu_custom_call.1} parent=27 // pred_fallthru
          _
        %s230 = sand.u32 %s82, 1
        %s231 = scalar_lea.sflag [#allocation5], %s230
        %s232 = sand.u32 %s82, 1
        %s233 = smul.addr %s232, 4
        %s234 = scalar_lea.vmem [#allocation4], %s233
        // Predicated region
        $region33: #{tpu_custom_call.1} parent=27 // pred_check
          %p235 = pneg %p95
        $region34: #{tpu_custom_call.1} parent=27 // pred_check_branch
          %237 = sbr.rel (%p235) target = $region36
        $region35: #{tpu_custom_call.1} parent=27 // pred_region
          %238 = dma.done %s231, 64
        $region36: #{tpu_custom_call.1} parent=27 // pred_fallthru
          _
        %s239 = sand.u32 %s52, 1
        %s240 = scalar_lea.sflag [#allocation3], %s239
        %s241 = sand.u32 %s52, 1
        %s242 = smul.addr %s241, 4
        %s243 = scalar_lea.vmem [#allocation2], %s242
        %p244 = pneg %p65
        %p245 = pneg %p62
        %s246 = sand.u32 %s82, 1
        %s247 = scalar_lea.sflag [#allocation5], %s246
        %s248 = sand.u32 %s82, 1
        %s249 = smul.addr %s248, 4
        %s250 = scalar_lea.vmem [#allocation4], %s249
        %p251 = pneg %p95
        %p252 = pneg %p92
        %p253 = pneg %p123
        %p254 = pneg %p120
        %p255 = scmp.lt.s32.totalorder %s26, 0
        %s256 = scalar_select %p255, %s26, 0
        %p257 = scmp.lt.s32.totalorder %s27, 1
        %s258 = scalar_select %p257, %s27, 1
        %s259 = smul.addr %s256, 2
        %s260 = sadd.s32 %s258, %s259
        %s261 = smul.addr %s260, 4
        %s262 = scalar_lea.vmem %s2, %s261
        %p263 = pneg %p151
        %p264 = pneg %p148
        %p265 = scmp.lt.s32.totalorder %s26, 0
        %s266 = scalar_select %p265, %s26, 0
        %p267 = scmp.lt.s32.totalorder %s27, 1
        %s268 = scalar_select %p267, %s27, 1
        %s269 = smul.addr %s266, 2
        %s270 = sadd.s32 %s268, %s269
        %s271 = smul.addr %s270, 4
        %s272 = scalar_lea.vmem %s3, %s271
        %s273 = sadd.s32 %s26, %s28
        %s274 = smul.u32 2, %s273
        %s275 = sadd.s32 %s26, %s28
        %s276 = smul.u32 2, %s275
        %p277 = scmp.lt.s32.totalorder %s26, 0
        %s278 = scalar_select %p277, %s26, 0
        %p279 = scmp.lt.s32.totalorder %s27, 1
        %s280 = scalar_select %p279, %s27, 1
        %s281 = smul.addr %s278, 2
        %s282 = sadd.s32 %s280, %s281
        %s283 = smul.addr %s282, 4
        %s284 = scalar_lea.vmem %s2, %s283
        %p285 = scmp.lt.s32.totalorder %s26, 0
        %s286 = scalar_select %p285, %s26, 0
        %p287 = scmp.lt.s32.totalorder %s27, 1
        %s288 = scalar_select %p287, %s27, 1
        %s289 = smul.addr %s286, 2
        %s290 = sadd.s32 %s288, %s289
        %s291 = smul.addr %s290, 4
        %s292 = scalar_lea.vmem %s3, %s291
        %p293 = scmp.eq.s32.totalorder %s28, 0
        // Predicated region
        $region37: #{tpu_custom_call.1} parent=27 // pred_check
          %p294 = pneg %p293
        $region38: #{tpu_custom_call.1} parent=27 // pred_check_branch
          %296 = sbr.rel (%p294) target = $region40
        $region39: #{tpu_custom_call.1} parent=27 // pred_region
          %vm297 = vcmask 3072
          %298 = vst.msk [vmem:[%s284] sm:$0xf] %vm297, 0.0
          %299 = vst.msk [vmem:[%s292] sm:$0xf] %vm297, 0.0
        $region40: #{tpu_custom_call.1} parent=27 // pred_fallthru
          _
        %v300 = vld [vmem:[%s225] sm:$0xf]
        %v301 = vunpack.c.l.bf16 %v300
        %v302 = vld [vmem:[%s234] sm:$0xf]
        %v303 = vunpack.c.l.bf16 %v302
        %v305 = vcombine.high %v301, %v301
        %vm307 = vcmask 1043456
        %v308 = vsel %vm307, %v301, -inf
        %v309 = vrot.slane %v308, 4
        %v310 = vmax.f32 %v308, %v309
        %v311 = vrot.slane %v310, 2
        %v312 = vmax.f32 %v310, %v311
        %v313 = vrot.slane %v312, 1
        %v314 = vmax.f32 %v312, %v313
        %v315 = vsel %vm307, %v305, -inf
        %v316 = vrot.slane %v315, 4
        %v317 = vmax.f32 %v315, %v316
        %v318 = vrot.slane %v317, 2
        %v319 = vmax.f32 %v317, %v318
        %v320 = vrot.slane %v319, 1
        %v321 = vmax.f32 %v319, %v320
        %v324 = vcombine.low %v314, %v321
        %v326 = vsub.f32 %v301, %v324
        %v327 = vmul.f32 %v326, 1.442695
        %v328 = vpow.pop %v327
        %v330 = vcombine.high %v328, %v328
        %v332 = vsel %vm307, %v328, 0.0
        %v333 = vrot.slane %v332, 4
        %v334 = vadd.f32 %v332, %v333
        %v335 = vrot.slane %v334, 2
        %v336 = vadd.f32 %v334, %v335
        %v337 = vrot.slane %v336, 1
        %v338 = vadd.f32 %v336, %v337
        %v339 = vsel %vm307, %v330, 0.0
        %v340 = vrot.slane %v339, 4
        %v341 = vadd.f32 %v339, %v340
        %v342 = vrot.slane %v341, 2
        %v343 = vadd.f32 %v341, %v342
        %v344 = vrot.slane %v343, 1
        %v345 = vadd.f32 %v343, %v344
        %v346 = vrcp.pop %v338
        %v347 = vrcp.pop %v345
        %v350 = vcombine.low %v346, %v347
        %v352 = vmul.f32 %v328, %v350
        %v353 = vmul.f32 %v352, %v352
        %v354 = vmul.f32 %v303, %v303
        %v355 = vadd.f32 %v353, %v354
        %v356 = vld [vmem:[%s284] sm:$0xf]
        %v357 = vmul.f32 %v352, %v303
        %v359 = vcombine.high %v357, %v357
        %v361 = vsel %vm307, %v357, 0.0
        %v362 = vsel %vm307, %v359, 0.0
        %v363 = vadd.f32 %v361, %v362
        %364 = vadd.xlane.f32.xlu0 %v363
        %v365 = vpop.xlane.xlu0 %364
        %v366 = vadd.f32 %v356, %v365
        %vm367 = vcmask 3072
        %368 = vst.msk [vmem:[%s284] sm:$0xf] %vm367, %v366
        %v369 = vld [vmem:[%s292] sm:$0xf]
        %v371 = vcombine.high %v355, %v355
        %v373 = vsel %vm307, %v355, 0.0
        %v374 = vsel %vm307, %v371, 0.0
        %v375 = vadd.f32 %v373, %v374
        %376 = vadd.xlane.f32.xlu0 %v375
        %v377 = vpop.xlane.xlu0 %376
        %v378 = vadd.f32 %v369, %v377
        %379 = vst.msk [vmem:[%s292] sm:$0xf] %vm367, %v378
        %p380 = scmp.lt.s32.totalorder %s26, 0
        %s381 = scalar_select %p380, %s26, 0
        %p382 = scmp.lt.s32.totalorder %s27, 1
        %s383 = scalar_select %p382, %s27, 1
        %s384 = smul.addr %s381, 2
        %s385 = sadd.s32 %s383, %s384
        %s386 = smul.addr %s385, 4
        %s387 = scalar_lea.vmem %s2, %s386
        %p388 = scmp.lt.s32.totalorder %s26, 0
        %s389 = scalar_select %p388, %s26, 0
        %p390 = scmp.lt.s32.totalorder %s27, 1
        %s391 = scalar_select %p390, %s27, 1
        %s392 = smul.addr %s389, 2
        %s393 = sadd.s32 %s391, %s392
        %s394 = smul.addr %s393, 4
        %s395 = scalar_lea.vmem %s3, %s394
        // Predicated region
        $region41: #{tpu_custom_call.1} parent=27 // pred_check
          %p396 = pneg %p120
        $region42: #{tpu_custom_call.1} parent=27 // pred_check_branch
          %398 = sbr.rel (%p396) target = $region44
        $region43: #{tpu_custom_call.1} parent=27 // pred_region
          _
        $region44: #{tpu_custom_call.1} parent=27 // pred_fallthru
          _
        // Predicated region
        $region45: #{tpu_custom_call.1} parent=27 // pred_check
          %p399 = pneg %p148
        $region46: #{tpu_custom_call.1} parent=27 // pred_check_branch
          %401 = sbr.rel (%p399) target = $region48
        $region47: #{tpu_custom_call.1} parent=27 // pred_region
          _
        $region48: #{tpu_custom_call.1} parent=27 // pred_fallthru
          _
      $region28: #{tpu_custom_call.1} parent=5 // pred_fallthru
        _
      %p402 = scmp.le.s32.totalorder 2, %s16
      // Predicated region
      $region49: #{tpu_custom_call.1} parent=5 // pred_check
        %p403 = pneg %p402
      $region50: #{tpu_custom_call.1} parent=5 // pred_check_branch
        %405 = sbr.rel (%p403) target = $region52
      $region51: #{tpu_custom_call.1} parent=5 // pred_region
        %s406 = ssub.s32 %s16, 2
        // Predicated region
        $region53: #{tpu_custom_call.1} parent=51 // pred_check
          %p407 = pneg %p126
        $region54: #{tpu_custom_call.1} parent=51 // pred_check_branch
          %409 = sbr.rel (%p407) target = $region56
        $region55: #{tpu_custom_call.1} parent=51 // pred_region
          %p410 = scmp.lt.s32.totalorder %s29, 0
          %s411 = scalar_select %p410, %s29, 0
          %p412 = scmp.lt.s32.totalorder %s30, 1
          %s413 = scalar_select %p412, %s30, 1
          %s414 = smul.addr %s411, 2
          %s415 = sadd.s32 %s413, %s414
          %s416 = smul.addr %s415, 4
          %s417 = scalar_lea.vmem %s2, %s416
        $region56: #{tpu_custom_call.1} parent=51 // pred_fallthru
          _
        // Predicated region
        $region57: #{tpu_custom_call.1} parent=51 // pred_check
          %p418 = pneg %p154
        $region58: #{tpu_custom_call.1} parent=51 // pred_check_branch
          %420 = sbr.rel (%p418) target = $region60
        $region59: #{tpu_custom_call.1} parent=51 // pred_region
          %p421 = scmp.lt.s32.totalorder %s29, 0
          %s422 = scalar_select %p421, %s29, 0
          %p423 = scmp.lt.s32.totalorder %s30, 1
          %s424 = scalar_select %p423, %s30, 1
          %s425 = smul.addr %s422, 2
          %s426 = sadd.s32 %s424, %s425
          %s427 = smul.addr %s426, 4
          %s428 = scalar_lea.vmem %s3, %s427
        $region60: #{tpu_custom_call.1} parent=51 // pred_fallthru
          _
      $region52: #{tpu_custom_call.1} parent=5 // pred_fallthru
        _
    $region6: #{tpu_custom_call.1} parent=1 // loop_footer
      %s20 = sadd.s32 1, %s16
    $region7: #{tpu_custom_call.1} parent=1 // loop_footer_branch
      %15 = sbr.rel target = $region3
    $region8: #{tpu_custom_call.1} parent=1 // loop_exit
      _
    %429 = vsyncpa [#allocation3], 1
    %s430 = scalar_lea.sflag [#allocation3], 1
    %431 = vsyncpa %s430, 1
    %432 = vsyncpa [#allocation5], 1
    %s433 = scalar_lea.sflag [#allocation5], 1
    %434 = vsyncpa %s433, 1

</llo_original>
